<compile_context>
chip_gen: v7x
topology: tpu7x:2x2x1
jax: 0.10.0
libtpu: 0.0.40
codegen_flags: <defaults>
</compile_context>

<pallas_src>
import jax
import jax.numpy as jnp
from jax.experimental import pallas as pl
from jax.experimental.pallas import tpu as pltpu  # noqa: F401  (TPU-specific tuning hooks)


# ----------------------------- model dims -----------------------------------
B = 2          # batch
C = 3          # image channels (RGB, as a timm vision model expects)
H = W = 16     # spatial
P = 4          # patch size
N = (H // P) * (W // P)   # 16 tokens per sample
PD = C * P * P            # 48 = flattened patch dim
D = 32                    # embed dim == feature_dim
HID = 64                  # MLP hidden dim
BN = B * N                # 32 stacked tokens (all samples folded together)

LN_EPS = 1e-6             # timm ViT LayerNorm eps
ATTN_SCALE = 1.0 / (D ** 0.5)
NEG_INF = -1e30           # additive mask value (exp underflows to exactly 0)

# --- packed-slab row offsets --------------------------------------------------
# attention weight slab (rows x D), bf16:  [wp | wq*scale | wk | wv | wo]
_WP0, _WQ0, _WK0, _WV0, _WO0 = 0, PD, PD + D, PD + 2 * D, PD + 3 * D
_WATTN_ROWS = PD + 4 * D                      # 176
# mlp weight slab (rows x HID), bf16:      [w1 ; w2 (lanes padded to HID)]
_W1_0, _W2_0 = 0, D
_WMLP_ROWS = D + HID                          # 96
# misc f32 slab (rows x MISC_LANES):       rows 0..8 = bp,g1,b1,g2,b2,bm2,gf,bf,bm1
#                                          rows 16.. = (BN,BN) additive attn mask
(_BP, _G1, _B1, _G2, _B2, _BM2, _GF, _BF, _BM1) = range(9)
_VEC_ROWS = 16                                # 9 used + pad to multiple of 8
_MASK0 = _VEC_ROWS
_MISC_ROWS = _VEC_ROWS + BN                   # 48
MISC_LANES = max(HID, BN)                     # 64

assert BN % 8 == 0 and MISC_LANES % 8 == 0


# ----------------------------- Pallas kernel ---------------------------------
def _vit_encoder_kernel(
    patch_ref,   # (BN, PD)          bf16  all samples' patches, stacked along tokens
    wattn_ref,   # (_WATTN_ROWS, D)  bf16  wp | wq*scale | wk | wv | wo
    wmlp_ref,    # (_WMLP_ROWS, HID) bf16  w1 ; w2 (lane-padded)
    misc_ref,    # (_MISC_ROWS, MISC_LANES) f32  scale/bias rows + block-diag mask
    out_ref,     # (B, D)            f32  pooled features
):
    f32 = jnp.float32

    vecs = misc_ref[0:_VEC_ROWS, :]                              # (16, MISC_LANES)
    bp, g1, b1 = vecs[_BP:_BP + 1, :D], vecs[_G1:_G1 + 1, :D], vecs[_B1:_B1 + 1, :D]
    g2, b2, bm2 = vecs[_G2:_G2 + 1, :D], vecs[_B2:_B2 + 1, :D], vecs[_BM2:_BM2 + 1, :D]
    gf, bf = vecs[_GF:_GF + 1, :D], vecs[_BF:_BF + 1, :D]
    bm1 = vecs[_BM1:_BM1 + 1, :HID]                              # (1, HID)
    attn_mask = misc_ref[_MASK0:_MASK0 + BN, 0:BN]               # (BN, BN)

    wp = wattn_ref[_WP0:_WP0 + PD, :]                            # (PD, D)
    wq = wattn_ref[_WQ0:_WQ0 + D, :]                             # (D, D), scale folded in
    wk = wattn_ref[_WK0:_WK0 + D, :]
    wv = wattn_ref[_WV0:_WV0 + D, :]
    wo = wattn_ref[_WO0:_WO0 + D, :]
    w1 = wmlp_ref[_W1_0:_W1_0 + D, :]                            # (D, HID)
    w2 = wmlp_ref[_W2_0:_W2_0 + HID, :D]                         # (HID, D)

    def layernorm(x, g, b):
        # one-pass stats: the two cross-lane reduces are independent (overlap on XLU)
        mu = jnp.mean(x, axis=-1, keepdims=True)
        ms = jnp.mean(x * x, axis=-1, keepdims=True)
        var = jnp.maximum(ms - mu * mu, 0.0)
        return (x - mu) * jax.lax.rsqrt(var + LN_EPS) * g + b

    # patch embedding (== stride-P conv in NCHW, flattened) on all B*N tokens
    x = jnp.dot(patch_ref[...], wp, preferred_element_type=f32) + bp        # (BN, D) f32

    # --- transformer block: attention (block-diagonal over stacked tokens) ---
    h = layernorm(x, g1, b1).astype(jnp.bfloat16)
    q = jnp.dot(h, wq, preferred_element_type=f32)               # (BN, D), pre-scaled
    k = jnp.dot(h, wk, preferred_element_type=f32)
    v = jnp.dot(h, wv, preferred_element_type=f32)

    s = jnp.einsum("qd,kd->qk", q, k, preferred_element_type=f32)           # (BN, BN)
    s = s + attn_mask                                            # -1e30 off-diagonal blocks
    s = s - jnp.max(s, axis=-1, keepdims=True)
    e = jnp.exp(s)
    p = e * pl.reciprocal(jnp.sum(e, axis=-1, keepdims=True), approx=True)
    attn = jnp.dot(p.astype(jnp.bfloat16), v.astype(jnp.bfloat16),
                   preferred_element_type=f32)                               # (BN, D)
    x = x + jnp.dot(attn.astype(jnp.bfloat16), wo, preferred_element_type=f32)

    # --- transformer block: MLP ----------------------------------------------
    h2 = layernorm(x, g2, b2).astype(jnp.bfloat16)
    m = jnp.dot(h2, w1, preferred_element_type=f32) + bm1                    # (BN, HID)
    # TODO(synk): timm ViT uses exact (erf) GELU; tanh-approx kept here for
    # guaranteed Mosaic lowering (numerically near-identical at these scales).
    m = jax.nn.gelu(m, approximate=True)
    x = x + jnp.dot(m.astype(jnp.bfloat16), w2, preferred_element_type=f32) + bm2

    # --- final norm + per-sample mean pool over tokens ------------------------
    x = layernorm(x, gf, bf)
    # (B, D)=(2,32) output -> lane width 32 (masked store); irrelevant at this
    # size, but keep the last dim a multiple of 128 if D/B ever grows.
    out_ref[...] = jnp.mean(x.reshape(B, N, D), axis=1)


# ----------------------------- weight packing --------------------------------
def _pad_lanes(v, lanes):
    v = v.astype(jnp.float32)
    return jnp.pad(v, ((0, 0), (0, lanes - v.shape[1])))


def pack_params(params):
    """Pack raw per-layer weights into the kernel's fused operand layout.

    Pure function of the weights: call ONCE outside the forward path so the
    concatenations/casts never run (or DMA) per forward call.
    """
    bf16 = jnp.bfloat16
    # attention-side slab (rows x D): wp | wq*(1/sqrt(D)) | wk | wv | wo
    w_attn = jnp.concatenate(
        [params["wp"], params["wq"] * ATTN_SCALE, params["wk"],
         params["wv"], params["wo"]], axis=0).astype(bf16)                   # (176, D)

    # mlp slab (rows x HID): w1 ; w2 lane-padded to HID
    w2_pad = jnp.pad(params["w2"], ((0, 0), (0, HID - D)))
    w_mlp = jnp.concatenate([params["w1"], w2_pad], axis=0).astype(bf16)     # (96, HID)

    # misc f32 slab: scale/bias rows, fc1 bias, and the block-diagonal additive
    # attention mask (0 within a sample, -1e30 across samples).
    tok = jnp.arange(BN, dtype=jnp.int32)
    same = (tok[:, None] // N) == (tok[None, :] // N)
    mask = jnp.where(same, 0.0, NEG_INF).astype(jnp.float32)                 # (BN, BN)
    rows = [
        _pad_lanes(params["bp"], MISC_LANES), _pad_lanes(params["g1"], MISC_LANES),
        _pad_lanes(params["b1"], MISC_LANES), _pad_lanes(params["g2"], MISC_LANES),
        _pad_lanes(params["b2"], MISC_LANES), _pad_lanes(params["bm2"], MISC_LANES),
        _pad_lanes(params["gf"], MISC_LANES), _pad_lanes(params["bf"], MISC_LANES),
        _pad_lanes(params["bm1"], MISC_LANES),
        jnp.zeros((_VEC_ROWS - 9, MISC_LANES), jnp.float32),
        _pad_lanes(mask, MISC_LANES),
    ]
    misc = jnp.concatenate(rows, axis=0)                                     # (48, MISC_LANES)
    return {"w_attn": w_attn, "w_mlp": w_mlp, "misc": misc}


# ----------------------------- wrapper ---------------------------------------
def vision_encoder_forward(x_nchw, packed):
    """x_nchw: (B, C, H, W) float32 -> (B, D) float32 pooled features."""
    b, c, h, w = x_nchw.shape
    assert (b, c, h, w) == (B, C, H, W)

    # Patchify in NCHW order (matches a stride-P conv patch embed in PyTorch),
    # cast to bf16 for MXU-native kernel operands.  The transpose + cast fuse
    # into a single pre-kernel XLA copy at these sizes.
    # TODO(synk): could fuse patchify in-kernel via static sublane slices.
    patches = x_nchw.reshape(b, c, h // P, P, w // P, P)
    patches = patches.transpose(0, 2, 4, 1, 3, 5).reshape(b * N, PD)
    patches = patches.astype(jnp.bfloat16)

    # Single grid-less invocation; whole working set (<0.1 MiB) is VMEM
    # resident.  For large batches: add a leading token-tile grid axis marked
    # "parallel" (shards across v7x's 2 TensorCores) and size tiles against
    # v7x's 64 MiB VMEM rather than v5e/v6e's 128 MiB.
    out = pl.pallas_call(
        _vit_encoder_kernel,
        out_shape=jax.ShapeDtypeStruct((b, D), jnp.float32),
    )(patches, packed["w_attn"], packed["w_mlp"], packed["misc"])
    return out


def init_params(key):
    ks = jax.random.split(key, 8)

    def w(k, shape, fan_in):
        return jax.random.normal(k, shape, jnp.float32) / jnp.sqrt(jnp.float32(fan_in))

    return {
        "wp": w(ks[0], (PD, D), PD),
        "bp": jnp.zeros((1, D), jnp.float32),
        "g1": jnp.ones((1, D), jnp.float32),
        "b1": jnp.zeros((1, D), jnp.float32),
        "wq": w(ks[1], (D, D), D),
        "wk": w(ks[2], (D, D), D),
        "wv": w(ks[3], (D, D), D),
        "wo": w(ks[4], (D, D), D),
        "g2": jnp.ones((1, D), jnp.float32),
        "b2": jnp.zeros((1, D), jnp.float32),
        "w1": w(ks[5], (D, HID), D),
        "bm1": jnp.zeros((1, HID), jnp.float32),
        "w2": w(ks[6], (HID, D), HID),
        "bm2": jnp.zeros((1, D), jnp.float32),
        "gf": jnp.ones((1, D), jnp.float32),
        "bf": jnp.zeros((1, D), jnp.float32),
    }


if __name__ == "__main__":
    key = jax.random.PRNGKey(0)
    k_img, k_par = jax.random.split(key)
    x = jax.random.normal(k_img, (B, C, H, W), jnp.float32)   # NCHW, like PyTorch
    params = init_params(k_par)

    # Weight packing hoisted out of the forward path: done once, up front.
    packed = jax.block_until_ready(pack_params(params))

    fwd = jax.jit(vision_encoder_forward)
    feats = fwd(x, packed)
    feats = jax.block_until_ready(feats)

    assert feats.shape == (B, D)
    assert bool(jnp.all(jnp.isfinite(feats)))
    print("KERNEL_OK")
</pallas_src>

<mosaic_0001>
module attributes {stable_mosaic.version = 11 : i64} {
  func.func @_vit_encoder_kernel(%arg0: memref<32x48xbf16, #tpu.memory_space<vmem>>, %arg1: memref<176x32xbf16, #tpu.memory_space<vmem>>, %arg2: memref<96x64xbf16, #tpu.memory_space<vmem>>, %arg3: memref<48x64xf32, #tpu.memory_space<vmem>>, %arg4: memref<2x32xf32, #tpu.memory_space<vmem>>) attributes {dimension_semantics = [], scalar_prefetch = 0 : i64, scratch_operands = 0 : i64, tpu.core_type = #tpu.core_type<tc>} {
    %c0 = arith.constant 0 : index
    %c0_0 = arith.constant 0 : index
    %0 = vector.load %arg3[%c0, %c0_0] : memref<48x64xf32, #tpu.memory_space<vmem>>, vector<16x64xf32>
    %1 = vector.extract_strided_slice %0 {offsets = [0, 0], sizes = [1, 32], strides = [1, 1]} : vector<16x64xf32> to vector<1x32xf32>
    %2 = vector.extract_strided_slice %0 {offsets = [1, 0], sizes = [1, 32], strides = [1, 1]} : vector<16x64xf32> to vector<1x32xf32>
    %3 = vector.extract_strided_slice %0 {offsets = [2, 0], sizes = [1, 32], strides = [1, 1]} : vector<16x64xf32> to vector<1x32xf32>
    %4 = vector.extract_strided_slice %0 {offsets = [3, 0], sizes = [1, 32], strides = [1, 1]} : vector<16x64xf32> to vector<1x32xf32>
    %5 = vector.extract_strided_slice %0 {offsets = [4, 0], sizes = [1, 32], strides = [1, 1]} : vector<16x64xf32> to vector<1x32xf32>
    %6 = vector.extract_strided_slice %0 {offsets = [5, 0], sizes = [1, 32], strides = [1, 1]} : vector<16x64xf32> to vector<1x32xf32>
    %7 = vector.extract_strided_slice %0 {offsets = [6, 0], sizes = [1, 32], strides = [1, 1]} : vector<16x64xf32> to vector<1x32xf32>
    %8 = vector.extract_strided_slice %0 {offsets = [7, 0], sizes = [1, 32], strides = [1, 1]} : vector<16x64xf32> to vector<1x32xf32>
    %9 = vector.extract_strided_slice %0 {offsets = [8, 0], sizes = [1, 64], strides = [1, 1]} : vector<16x64xf32> to vector<1x64xf32>
    %c16 = arith.constant 16 : index
    %c0_1 = arith.constant 0 : index
    %10 = vector.load %arg3[%c16, %c0_1] : memref<48x64xf32, #tpu.memory_space<vmem>>, vector<32x32xf32>
    %c0_2 = arith.constant 0 : index
    %c0_3 = arith.constant 0 : index
    %11 = vector.load %arg1[%c0_2, %c0_3] : memref<176x32xbf16, #tpu.memory_space<vmem>>, vector<48x32xbf16>
    %c48 = arith.constant 48 : index
    %c0_4 = arith.constant 0 : index
    %12 = vector.load %arg1[%c48, %c0_4] : memref<176x32xbf16, #tpu.memory_space<vmem>>, vector<32x32xbf16>
    %c80 = arith.constant 80 : index
    %c0_5 = arith.constant 0 : index
    %13 = vector.load %arg1[%c80, %c0_5] : memref<176x32xbf16, #tpu.memory_space<vmem>>, vector<32x32xbf16>
    %c112 = arith.constant 112 : index
    %c0_6 = arith.constant 0 : index
    %14 = vector.load %arg1[%c112, %c0_6] : memref<176x32xbf16, #tpu.memory_space<vmem>>, vector<32x32xbf16>
    %c144 = arith.constant 144 : index
    %c0_7 = arith.constant 0 : index
    %15 = vector.load %arg1[%c144, %c0_7] : memref<176x32xbf16, #tpu.memory_space<vmem>>, vector<32x32xbf16>
    %c0_8 = arith.constant 0 : index
    %c0_9 = arith.constant 0 : index
    %16 = vector.load %arg2[%c0_8, %c0_9] : memref<96x64xbf16, #tpu.memory_space<vmem>>, vector<32x64xbf16>
    %c32 = arith.constant 32 : index
    %c0_10 = arith.constant 0 : index
    %17 = vector.load %arg2[%c32, %c0_10] : memref<96x64xbf16, #tpu.memory_space<vmem>>, vector<64x32xbf16>
    %c0_11 = arith.constant 0 : index
    %c0_12 = arith.constant 0 : index
    %18 = vector.load %arg0[%c0_11, %c0_12] : memref<32x48xbf16, #tpu.memory_space<vmem>>, vector<32x48xbf16>
    %cst = arith.constant dense<0.000000e+00> : vector<32x32xf32>
    %19 = tpu.matmul %18, %11, %cst {dimension_numbers = #tpu.dot_dimension_numbers<[1], [0], [0], [1], [0, 0, 1, 1], [], []>} : vector<32x48xbf16>, vector<48x32xbf16>, vector<32x32xf32> -> vector<32x32xf32>
    %20 = vector.broadcast %1 : vector<1x32xf32> to vector<32x32xf32>
    %21 = arith.addf %19, %20 : vector<32x32xf32>
    %cst_13 = arith.constant dense<0.000000e+00> : vector<32xf32>
    %22 = vector.multi_reduction <add>, %21, %cst_13 [1] : vector<32x32xf32> to vector<32xf32>
    %23 = vector.shape_cast %22 : vector<32xf32> to vector<32x1xf32>
    %cst_14 = arith.constant 3.200000e+01 : f32
    %24 = vector.broadcast %cst_14 : f32 to vector<32x1xf32>
    %25 = arith.divf %23, %24 : vector<32x1xf32>
    %26 = arith.mulf %21, %21 : vector<32x32xf32>
    %cst_15 = arith.constant dense<0.000000e+00> : vector<32xf32>
    %27 = vector.multi_reduction <add>, %26, %cst_15 [1] : vector<32x32xf32> to vector<32xf32>
    %28 = vector.shape_cast %27 : vector<32xf32> to vector<32x1xf32>
    %cst_16 = arith.constant 3.200000e+01 : f32
    %29 = vector.broadcast %cst_16 : f32 to vector<32x1xf32>
    %30 = arith.divf %28, %29 : vector<32x1xf32>
    %31 = arith.mulf %25, %25 : vector<32x1xf32>
    %32 = arith.subf %30, %31 : vector<32x1xf32>
    %cst_17 = arith.constant 0.000000e+00 : f32
    %33 = vector.broadcast %cst_17 : f32 to vector<32x1xf32>
    %34 = arith.maximumf %32, %33 : vector<32x1xf32>
    %35 = vector.broadcast %25 : vector<32x1xf32> to vector<32x32xf32>
    %36 = arith.subf %21, %35 : vector<32x32xf32>
    %cst_18 = arith.constant 9.99999997E-7 : f32
    %37 = vector.broadcast %cst_18 : f32 to vector<32x1xf32>
    %38 = arith.addf %34, %37 : vector<32x1xf32>
    %39 = math.rsqrt %38 : vector<32x1xf32>
    %40 = vector.broadcast %39 : vector<32x1xf32> to vector<32x32xf32>
    %41 = arith.mulf %36, %40 : vector<32x32xf32>
    %42 = vector.broadcast %2 : vector<1x32xf32> to vector<32x32xf32>
    %43 = arith.mulf %41, %42 : vector<32x32xf32>
    %44 = vector.broadcast %3 : vector<1x32xf32> to vector<32x32xf32>
    %45 = arith.addf %43, %44 : vector<32x32xf32>
    %46 = arith.truncf %45 : vector<32x32xf32> to vector<32x32xbf16>
    %cst_19 = arith.constant dense<0.000000e+00> : vector<32x32xf32>
    %47 = tpu.matmul %46, %12, %cst_19 {dimension_numbers = #tpu.dot_dimension_numbers<[1], [0], [0], [1], [0, 0, 1, 1], [], []>} : vector<32x32xbf16>, vector<32x32xbf16>, vector<32x32xf32> -> vector<32x32xf32>
    %cst_20 = arith.constant dense<0.000000e+00> : vector<32x32xf32>
    %48 = tpu.matmul %46, %13, %cst_20 {dimension_numbers = #tpu.dot_dimension_numbers<[1], [0], [0], [1], [0, 0, 1, 1], [], []>} : vector<32x32xbf16>, vector<32x32xbf16>, vector<32x32xf32> -> vector<32x32xf32>
    %cst_21 = arith.constant dense<0.000000e+00> : vector<32x32xf32>
    %49 = tpu.matmul %46, %14, %cst_21 {dimension_numbers = #tpu.dot_dimension_numbers<[1], [0], [0], [1], [0, 0, 1, 1], [], []>} : vector<32x32xbf16>, vector<32x32xbf16>, vector<32x32xf32> -> vector<32x32xf32>
    "tpu.trace_start"() <{level = 10 : i32, message = "qd,kd->qk"}> : () -> ()
    %cst_22 = arith.constant dense<0.000000e+00> : vector<32x32xf32>
    %50 = tpu.matmul %47, %48, %cst_22 {dimension_numbers = #tpu.dot_dimension_numbers<[1], [1], [0], [0], [0, 0, 1, 0], [], []>} : vector<32x32xf32>, vector<32x32xf32>, vector<32x32xf32> -> vector<32x32xf32>
    "tpu.trace_stop"() : () -> ()
    %51 = arith.addf %50, %10 : vector<32x32xf32>
    %cst_23 = arith.constant dense<0xFF800000> : vector<32xf32>
    %52 = vector.multi_reduction <maximumf>, %51, %cst_23 [1] : vector<32x32xf32> to vector<32xf32>
    %53 = vector.shape_cast %52 : vector<32xf32> to vector<32x1xf32>
    %54 = vector.broadcast %53 : vector<32x1xf32> to vector<32x32xf32>
    %55 = arith.subf %51, %54 : vector<32x32xf32>
    %56 = math.exp %55 : vector<32x32xf32>
    %cst_24 = arith.constant dense<0.000000e+00> : vector<32xf32>
    %57 = vector.multi_reduction <add>, %56, %cst_24 [1] : vector<32x32xf32> to vector<32xf32>
    %58 = vector.shape_cast %57 : vector<32xf32> to vector<32x1xf32>
    %59 = tpu.reciprocal %58 {approx = true} : vector<32x1xf32> -> vector<32x1xf32>
    %60 = vector.broadcast %59 : vector<32x1xf32> to vector<32x32xf32>
    %61 = arith.mulf %56, %60 : vector<32x32xf32>
    %62 = arith.truncf %61 : vector<32x32xf32> to vector<32x32xbf16>
    %63 = arith.truncf %49 : vector<32x32xf32> to vector<32x32xbf16>
    %cst_25 = arith.constant dense<0.000000e+00> : vector<32x32xf32>
    %64 = tpu.matmul %62, %63, %cst_25 {dimension_numbers = #tpu.dot_dimension_numbers<[1], [0], [0], [1], [0, 0, 1, 1], [], []>} : vector<32x32xbf16>, vector<32x32xbf16>, vector<32x32xf32> -> vector<32x32xf32>
    %65 = arith.truncf %64 : vector<32x32xf32> to vector<32x32xbf16>
    %cst_26 = arith.constant dense<0.000000e+00> : vector<32x32xf32>
    %66 = tpu.matmul %65, %15, %cst_26 {dimension_numbers = #tpu.dot_dimension_numbers<[1], [0], [0], [1], [0, 0, 1, 1], [], []>} : vector<32x32xbf16>, vector<32x32xbf16>, vector<32x32xf32> -> vector<32x32xf32>
    %67 = arith.addf %21, %66 : vector<32x32xf32>
    %cst_27 = arith.constant dense<0.000000e+00> : vector<32xf32>
    %68 = vector.multi_reduction <add>, %67, %cst_27 [1] : vector<32x32xf32> to vector<32xf32>
    %69 = vector.shape_cast %68 : vector<32xf32> to vector<32x1xf32>
    %cst_28 = arith.constant 3.200000e+01 : f32
    %70 = vector.broadcast %cst_28 : f32 to vector<32x1xf32>
    %71 = arith.divf %69, %70 : vector<32x1xf32>
    %72 = arith.mulf %67, %67 : vector<32x32xf32>
    %cst_29 = arith.constant dense<0.000000e+00> : vector<32xf32>
    %73 = vector.multi_reduction <add>, %72, %cst_29 [1] : vector<32x32xf32> to vector<32xf32>
    %74 = vector.shape_cast %73 : vector<32xf32> to vector<32x1xf32>
    %cst_30 = arith.constant 3.200000e+01 : f32
    %75 = vector.broadcast %cst_30 : f32 to vector<32x1xf32>
    %76 = arith.divf %74, %75 : vector<32x1xf32>
    %77 = arith.mulf %71, %71 : vector<32x1xf32>
    %78 = arith.subf %76, %77 : vector<32x1xf32>
    %cst_31 = arith.constant 0.000000e+00 : f32
    %79 = vector.broadcast %cst_31 : f32 to vector<32x1xf32>
    %80 = arith.maximumf %78, %79 : vector<32x1xf32>
    %81 = vector.broadcast %71 : vector<32x1xf32> to vector<32x32xf32>
    %82 = arith.subf %67, %81 : vector<32x32xf32>
    %cst_32 = arith.constant 9.99999997E-7 : f32
    %83 = vector.broadcast %cst_32 : f32 to vector<32x1xf32>
    %84 = arith.addf %80, %83 : vector<32x1xf32>
    %85 = math.rsqrt %84 : vector<32x1xf32>
    %86 = vector.broadcast %85 : vector<32x1xf32> to vector<32x32xf32>
    %87 = arith.mulf %82, %86 : vector<32x32xf32>
    %88 = vector.broadcast %4 : vector<1x32xf32> to vector<32x32xf32>
    %89 = arith.mulf %87, %88 : vector<32x32xf32>
    %90 = vector.broadcast %5 : vector<1x32xf32> to vector<32x32xf32>
    %91 = arith.addf %89, %90 : vector<32x32xf32>
    %92 = arith.truncf %91 : vector<32x32xf32> to vector<32x32xbf16>
    %cst_33 = arith.constant dense<0.000000e+00> : vector<32x64xf32>
    %93 = tpu.matmul %92, %16, %cst_33 {dimension_numbers = #tpu.dot_dimension_numbers<[1], [0], [0], [1], [0, 0, 1, 1], [], []>} : vector<32x32xbf16>, vector<32x64xbf16>, vector<32x64xf32> -> vector<32x64xf32>
    %94 = vector.broadcast %9 : vector<1x64xf32> to vector<32x64xf32>
    %95 = arith.addf %93, %94 : vector<32x64xf32>
    %96 = arith.mulf %95, %95 : vector<32x64xf32>
    %97 = arith.mulf %95, %96 : vector<32x64xf32>
    %cst_34 = arith.constant 4.471500e-02 : f32
    %98 = vector.broadcast %cst_34 : f32 to vector<32x64xf32>
    %99 = arith.mulf %98, %97 : vector<32x64xf32>
    %100 = arith.addf %95, %99 : vector<32x64xf32>
    %cst_35 = arith.constant 0.797884583 : f32
    %101 = vector.broadcast %cst_35 : f32 to vector<32x64xf32>
    %102 = arith.mulf %101, %100 : vector<32x64xf32>
    %103 = math.tanh %102 : vector<32x64xf32>
    %cst_36 = arith.constant 1.000000e+00 : f32
    %104 = vector.broadcast %cst_36 : f32 to vector<32x64xf32>
    %105 = arith.addf %104, %103 : vector<32x64xf32>
    %cst_37 = arith.constant 5.000000e-01 : f32
    %106 = vector.broadcast %cst_37 : f32 to vector<32x64xf32>
    %107 = arith.mulf %106, %105 : vector<32x64xf32>
    %108 = arith.mulf %95, %107 : vector<32x64xf32>
    %109 = arith.truncf %108 : vector<32x64xf32> to vector<32x64xbf16>
    %cst_38 = arith.constant dense<0.000000e+00> : vector<32x32xf32>
    %110 = tpu.matmul %109, %17, %cst_38 {dimension_numbers = #tpu.dot_dimension_numbers<[1], [0], [0], [1], [0, 0, 1, 1], [], []>} : vector<32x64xbf16>, vector<64x32xbf16>, vector<32x32xf32> -> vector<32x32xf32>
    %111 = arith.addf %67, %110 : vector<32x32xf32>
    %112 = vector.broadcast %6 : vector<1x32xf32> to vector<32x32xf32>
    %113 = arith.addf %111, %112 : vector<32x32xf32>
    %cst_39 = arith.constant dense<0.000000e+00> : vector<32xf32>
    %114 = vector.multi_reduction <add>, %113, %cst_39 [1] : vector<32x32xf32> to vector<32xf32>
    %115 = vector.shape_cast %114 : vector<32xf32> to vector<32x1xf32>
    %cst_40 = arith.constant 3.200000e+01 : f32
    %116 = vector.broadcast %cst_40 : f32 to vector<32x1xf32>
    %117 = arith.divf %115, %116 : vector<32x1xf32>
    %118 = arith.mulf %113, %113 : vector<32x32xf32>
    %cst_41 = arith.constant dense<0.000000e+00> : vector<32xf32>
    %119 = vector.multi_reduction <add>, %118, %cst_41 [1] : vector<32x32xf32> to vector<32xf32>
    %120 = vector.shape_cast %119 : vector<32xf32> to vector<32x1xf32>
    %cst_42 = arith.constant 3.200000e+01 : f32
    %121 = vector.broadcast %cst_42 : f32 to vector<32x1xf32>
    %122 = arith.divf %120, %121 : vector<32x1xf32>
    %123 = arith.mulf %117, %117 : vector<32x1xf32>
    %124 = arith.subf %122, %123 : vector<32x1xf32>
    %cst_43 = arith.constant 0.000000e+00 : f32
    %125 = vector.broadcast %cst_43 : f32 to vector<32x1xf32>
    %126 = arith.maximumf %124, %125 : vector<32x1xf32>
    %127 = vector.broadcast %117 : vector<32x1xf32> to vector<32x32xf32>
    %128 = arith.subf %113, %127 : vector<32x32xf32>
    %cst_44 = arith.constant 9.99999997E-7 : f32
    %129 = vector.broadcast %cst_44 : f32 to vector<32x1xf32>
    %130 = arith.addf %126, %129 : vector<32x1xf32>
    %131 = math.rsqrt %130 : vector<32x1xf32>
    %132 = vector.broadcast %131 : vector<32x1xf32> to vector<32x32xf32>
    %133 = arith.mulf %128, %132 : vector<32x32xf32>
    %134 = vector.broadcast %7 : vector<1x32xf32> to vector<32x32xf32>
    %135 = arith.mulf %133, %134 : vector<32x32xf32>
    %136 = vector.broadcast %8 : vector<1x32xf32> to vector<32x32xf32>
    %137 = arith.addf %135, %136 : vector<32x32xf32>
    %138 = vector.shape_cast %137 : vector<32x32xf32> to vector<2x16x32xf32>
    %cst_45 = arith.constant dense<0.000000e+00> : vector<2x32xf32>
    %139 = vector.multi_reduction <add>, %138, %cst_45 [1] : vector<2x16x32xf32> to vector<2x32xf32>
    %cst_46 = arith.constant 1.600000e+01 : f32
    %140 = vector.broadcast %cst_46 : f32 to vector<2x32xf32>
    %141 = arith.divf %139, %140 : vector<2x32xf32>
    %c0_47 = arith.constant 0 : index
    %c0_48 = arith.constant 0 : index
    %142 = vector.load %arg4[%c0_47, %c0_48] : memref<2x32xf32, #tpu.memory_space<vmem>>, vector<2x32xf32>
    tpu.vector_store %arg4[%c0_47, %c0_48], %141 {strides = array<i32>} : memref<2x32xf32, #tpu.memory_space<vmem>>, vector<2x32xf32>,
    return
  }
}

</mosaic_0001>

<llo_original>
// kernel: vision_encoder_forward.1
$region0: #{vision_encoder_forward.1}
  #allocation0 [shape = 'u32[]', space=smem, size = 0x4, offset = 0x4, fixed_abs, tag = 'smem constant byte address 0x4 - core index']
  #allocation1 [shape = 'u32[144,128]{1,0:T(1,128)}', space=vmem, size = 0x12000, scoped, tag = 'internal scratch']
  %s0 = inlined_call_operand.vmem [shape: bf16[32,48], index: 0, kind: input, shape index: {}]
  %s1 = inlined_call_operand.vmem [shape: bf16[176,32], index: 1, kind: input, shape index: {}]
  %s2 = inlined_call_operand.vmem [shape: bf16[96,64], index: 2, kind: input, shape index: {}]
  %s3 = inlined_call_operand.vmem [shape: f32[48,64], index: 3, kind: input, shape index: {}]
  %s4 = inlined_call_operand.hbm [shape: f32[2,32], index: 4, kind: output, shape index: {}]
  %s5 = sld [smem:[#allocation0]]
  $region26: #{vision_encoder_forward.1} parent=0
    _
  %s7 = ssub.s32 1, %s5
  %s8 = scalar_select 0, %s7, %s5
  $region1: #{vision_encoder_forward.1} parent=0
    #allocation2 [shape = 'u8[1024]{0}', space=vmem, size = 0x400, scoped, tag = 'output window, operand 0, single buffered']
    #allocation3 [shape = 's32[1]{0}', space=sflag, size = 0x4, scoped, tag = 'scoped memory for vision_encoder_forward.1']
    %9 = vsyncpa [#allocation3], 0
    // Predicated region
    $region2: #{vision_encoder_forward.1} parent=1 // pred_check
      _
    $region3: #{vision_encoder_forward.1} parent=1 // pred_check_branch
      %11 = sbr.rel (0) target = $region5
    $region4: #{vision_encoder_forward.1} parent=1 // pred_region
      _
    $region5: #{vision_encoder_forward.1} parent=1 // pred_fallthru
      _
    // Predicated region
    $region6: #{vision_encoder_forward.1} parent=1 // pred_check
      _
    $region7: #{vision_encoder_forward.1} parent=1 // pred_check_branch
      %13 = sbr.rel (0) target = $region9
    $region8: #{vision_encoder_forward.1} parent=1 // pred_region
      _
    $region9: #{vision_encoder_forward.1} parent=1 // pred_fallthru
      _
    // Predicated region
    $region10: #{vision_encoder_forward.1} parent=1 // pred_check
      _
    $region11: #{vision_encoder_forward.1} parent=1 // pred_check_branch
      %15 = sbr.rel (0) target = $region13
    $region12: #{vision_encoder_forward.1} parent=1 // pred_region
      _
    $region13: #{vision_encoder_forward.1} parent=1 // pred_fallthru
      _
    // Predicated region
    $region14: #{vision_encoder_forward.1} parent=1 // pred_check
      _
    $region15: #{vision_encoder_forward.1} parent=1 // pred_check_branch
      %17 = sbr.rel (0) target = $region17
    $region16: #{vision_encoder_forward.1} parent=1 // pred_region
      _
    $region17: #{vision_encoder_forward.1} parent=1 // pred_fallthru
      _
    %v19 = vld [vmem:[%s3] sm:$0xff]
    %v20 = vld [vmem:[%s3 + $0x8] sm:$0xff]
    %v21 = vld [vmem:[%s3 + $0x10] sm:$0xff]
    %v22 = vld [vmem:[%s3 + $0x18] sm:$0xff]
    %v23 = vld [vmem:[%s3 + $0x20] sm:$0xff]
    %v24 = vld [vmem:[%s3 + $0x28] sm:$0xff]
    %v25 = vld [vmem:[%s1] sm:$0xf]
    %v26 = vld [vmem:[%s1 + $0x4] sm:$0xf]
    %v27 = vld [vmem:[%s1 + $0x8] sm:$0xf]
    %v28 = vld [vmem:[%s1 + $0xc] sm:$0xf]
    %v29 = vld [vmem:[%s1 + $0x10] sm:$0xf]
    %v30 = vld [vmem:[%s1 + $0x14] sm:$0xf]
    %v31 = vld [vmem:[%s1 + $0x18] sm:$0xf]
    %v32 = vld [vmem:[%s1 + $0x1c] sm:$0xf]
    %v33 = vld [vmem:[%s1 + $0x20] sm:$0xf]
    %v34 = vld [vmem:[%s1 + $0x24] sm:$0xf]
    %v35 = vld [vmem:[%s1 + $0x28] sm:$0xf]
    %v36 = vld [vmem:[%s1 + $0x2c] sm:$0xf]
    %v37 = vld [vmem:[%s1 + $0x30] sm:$0xf]
    %v38 = vld [vmem:[%s1 + $0x34] sm:$0xf]
    %v39 = vld [vmem:[%s1 + $0x38] sm:$0xf]
    %v40 = vld [vmem:[%s1 + $0x3c] sm:$0xf]
    %v41 = vld [vmem:[%s1 + $0x40] sm:$0xf]
    %v42 = vld [vmem:[%s1 + $0x44] sm:$0xf]
    %v43 = vld [vmem:[%s1 + $0x48] sm:$0xf]
    %v44 = vld [vmem:[%s1 + $0x4c] sm:$0xf]
    %v45 = vld [vmem:[%s1 + $0x50] sm:$0xf]
    %v46 = vld [vmem:[%s1 + $0x54] sm:$0xf]
    %v47 = vld [vmem:[%s2] sm:$0xf]
    %v48 = vld [vmem:[%s2 + $0x4] sm:$0xf]
    %v49 = vld [vmem:[%s2 + $0x8] sm:$0xf]
    %v50 = vld [vmem:[%s2 + $0xc] sm:$0xf]
    %v51 = vld [vmem:[%s2 + $0x10] sm:$0xf]
    %v52 = vld [vmem:[%s2 + $0x14] sm:$0xf]
    %v53 = vld [vmem:[%s2 + $0x18] sm:$0xf]
    %v54 = vld [vmem:[%s2 + $0x1c] sm:$0xf]
    %v55 = vld [vmem:[%s2 + $0x20] sm:$0xf]
    %v56 = vld [vmem:[%s2 + $0x24] sm:$0xf]
    %v57 = vld [vmem:[%s2 + $0x28] sm:$0xf]
    %v58 = vld [vmem:[%s2 + $0x2c] sm:$0xf]
    %v59 = vld [vmem:[%s0] sm:$0xf]
    %v60 = vld [vmem:[%s0 + $0x4] sm:$0xf]
    %v61 = vld [vmem:[%s0 + $0x8] sm:$0xf]
    %v62 = vld [vmem:[%s0 + $0xc] sm:$0xf]
    %v63 = vlaneseq
    %v64 = vshrl.u32 %v63, 7
    %v65 = vsub.s32 0, %v64
    %v66 = vrot.slane %v19, %v65
    %v71 = vunpack.c.l.b16 %v59
    %v72 = vunpack.c.l.b16 %v60
    %v73 = vunpack.c.l.b16 %v61
    %v74 = vunpack.c.l.b16 %v62
    %v75 = vpack.c.b16 %v72, %v71
    %v76 = vpack.c.b16 %v74, %v73
    %v83 = vunpack.c.l.b16 %v25
    %v84 = vunpack.c.l.b16 %v26
    %v85 = vunpack.c.l.b16 %v27
    %v86 = vunpack.c.l.b16 %v28
    %v87 = vunpack.c.l.b16 %v29
    %v88 = vunpack.c.l.b16 %v30
    %v89 = vpack.c.b16 %v84, %v83
    %v90 = vpack.c.b16 %v86, %v85
    %v91 = vpack.c.b16 %v88, %v87
    %vm95 = vcmask 392192
    %v97 = vsel %vm95, %v75, 0
    %v100 = vsel %vm95, %v76, 0
    %102 = vmatprep.subr.bf16.mxu0 0
    %103 = vmatpush1.bf16.msra.mxu0 %v89
    %104 = vmatprep.subr.bf16.mxu0 0
    %105 = vmatpush1.bf16.msra.mxu0 %v90
    %106 = vmatprep.subr.bf16.mxu0 0
    %107 = vmatpush1.bf16.msra.mxu0 %v91
    %108 = vmatprep.subr.bf16.mxu0 0
    %109 = vmatpush1.bf16.msra.mxu0 0
    %110 = vmatprep.subr.bf16.mxu0 0
    %111 = vmatpush1.bf16.msra.mxu0 0
    %112 = vmatprep.subr.bf16.mxu0 0
    %113 = vmatpush1.bf16.msra.mxu0 0
    %114 = vmatprep.subr.bf16.mxu0 0
    %115 = vmatpush1.bf16.msra.mxu0 0
    %116 = vmatprep.subr.bf16.mxu0 0
    %117 = vmatpush1.bf16.msra.mxu0 0
    %118 = vmatprep.subr.bf16.mxu0 0
    %119 = vmatpush1.bf16.msra.mxu0 0
    %120 = vmatprep.subr.bf16.mxu0 0
    %121 = vmatpush1.bf16.msra.mxu0 0
    %122 = vmatprep.subr.bf16.mxu0 0
    %123 = vmatpush1.bf16.msra.mxu0 0
    %124 = vmatprep.subr.bf16.mxu0 0
    %125 = vmatpush1.bf16.msra.mxu0 0
    %126 = vmatprep.subr.bf16.mxu0 0
    %127 = vmatpush1.bf16.msra.mxu0 0
    %128 = vmatprep.subr.bf16.mxu0 0
    %129 = vmatpush1.bf16.msra.mxu0 0
    %130 = vmatprep.subr.bf16.mxu0 0
    %131 = vmatpush1.bf16.msra.mxu0 0
    %132 = vmatprep.subr.bf16.mxu0 0
    %133 = vmatpush1.bf16.msra.mxu0 0
    %134 = vmatprep.mubr.bf16.mxu0 0
    %135 = vmatmul.mubr.bf16.gmra.mrb[0].mxu0 %v97
    %v136 = vpop.f32.mrb[0].mxu0
    %v137 = vadd.f32 %v66, %v136
    %v138 = vpop.f32.mrb[0].mxu0
    %v139 = vpop.f32.mrb[0].mxu0
    %v140 = vadd.f32 %v66, %v139
    %v141 = vpop.f32.mrb[0].mxu0
    %142 = vmatprep.mubr.bf16.mxu0 0
    %143 = vmatmul.mubr.bf16.gmra.mrb[0].mxu0 %v100
    %v144 = vpop.f32.mrb[0].mxu0
    %v145 = vadd.f32 %v66, %v144
    %v146 = vpop.f32.mrb[0].mxu0
    %v147 = vpop.f32.mrb[0].mxu0
    %v148 = vadd.f32 %v66, %v147
    %v149 = vpop.f32.mrb[0].mxu0
    %150 = vdwg.mxu0
    %vm151 = vcmask 261120
    %v152 = vsel %vm151, %v137, 0.0
    %153 = vadd.xlane.f32.xlu0 %v152
    %v154 = vpop.xlane.xlu0 %153
    %v155 = vsel %vm151, %v140, 0.0
    %156 = vadd.xlane.f32.xlu0 %v155
    %v157 = vpop.xlane.xlu0 %156
    %v158 = vsel %vm151, %v145, 0.0
    %159 = vadd.xlane.f32.xlu0 %v158
    %v160 = vpop.xlane.xlu0 %159
    %v161 = vsel %vm151, %v148, 0.0
    %162 = vadd.xlane.f32.xlu0 %v161
    %v163 = vpop.xlane.xlu0 %162
    %v164 = vrcp.pop 32.0
    %v165 = vmul.f32 %v154, %v164
    %v166 = vmul.f32 %v157, %v164
    %v167 = vmul.f32 %v160, %v164
    %v168 = vmul.f32 %v163, %v164
    %v169 = vmul.f32 %v137, %v137
    %v170 = vmul.f32 %v140, %v140
    %v171 = vmul.f32 %v145, %v145
    %v172 = vmul.f32 %v148, %v148
    %v173 = vsel %vm151, %v169, 0.0
    %174 = vadd.xlane.f32.xlu0 %v173
    %v175 = vpop.xlane.xlu0 %174
    %v176 = vsel %vm151, %v170, 0.0
    %177 = vadd.xlane.f32.xlu0 %v176
    %v178 = vpop.xlane.xlu0 %177
    %v179 = vsel %vm151, %v171, 0.0
    %180 = vadd.xlane.f32.xlu0 %v179
    %v181 = vpop.xlane.xlu0 %180
    %v182 = vsel %vm151, %v172, 0.0
    %183 = vadd.xlane.f32.xlu0 %v182
    %v184 = vpop.xlane.xlu0 %183
    %v185 = vmul.f32 %v175, %v164
    %v186 = vmul.f32 %v178, %v164
    %v187 = vmul.f32 %v181, %v164
    %v188 = vmul.f32 %v184, %v164
    %v189 = vmul.f32 %v165, %v165
    %v190 = vmul.f32 %v166, %v166
    %v191 = vmul.f32 %v167, %v167
    %v192 = vmul.f32 %v168, %v168
    %v193 = vsub.f32 %v185, %v189
    %v194 = vsub.f32 %v186, %v190
    %v195 = vsub.f32 %v187, %v191
    %v196 = vsub.f32 %v188, %v192
    %v197 = vmax.f32 %v193, 0.0
    %v198 = vmax.f32 %v194, 0.0
    %v199 = vmax.f32 %v195, 0.0
    %v200 = vmax.f32 %v196, 0.0
    %v201 = vsub.f32 %v137, %v165
    %v202 = vsub.f32 %v140, %v166
    %v203 = vsub.f32 %v145, %v167
    %v204 = vsub.f32 %v148, %v168
    %v205 = vadd.f32 %v197, 1e-06
    %v206 = vadd.f32 %v198, 1e-06
    %v207 = vadd.f32 %v199, 1e-06
    %v208 = vadd.f32 %v200, 1e-06
    %v209 = vrsqrt.pop %v205
    %v210 = vrsqrt.pop %v206
    %v211 = vrsqrt.pop %v207
    %v212 = vrsqrt.pop %v208
    %v213 = vmul.f32 %v201, %v209
    %v214 = vmul.f32 %v202, %v210
    %v215 = vmul.f32 %v203, %v211
    %v216 = vmul.f32 %v204, %v212
    %v217 = vlaneseq
    %v218 = vshrl.u32 %v217, 7
    %v219 = vsub.s32 1, %v218
    %v220 = vrot.slane %v19, %v219
    %v221 = vmul.f32 %v213, %v220
    %v222 = vmul.f32 %v214, %v220
    %v223 = vmul.f32 %v215, %v220
    %v224 = vmul.f32 %v216, %v220
    %v225 = vlaneseq
    %v226 = vshrl.u32 %v225, 7
    %v227 = vsub.s32 2, %v226
    %v228 = vrot.slane %v19, %v227
    %v229 = vadd.f32 %v221, %v228
    %v230 = vadd.f32 %v222, %v228
    %v231 = vadd.f32 %v223, %v228
    %v232 = vadd.f32 %v224, %v228
    %v233 = vpack.c.bf16 %v230, %v229
    %v234 = vpack.c.bf16 %v232, %v231
    %v239 = vunpack.c.l.b16 %v31
    %v240 = vunpack.c.l.b16 %v32
    %v241 = vunpack.c.l.b16 %v33
    %v242 = vunpack.c.l.b16 %v34
    %v243 = vpack.c.b16 %v240, %v239
    %v244 = vpack.c.b16 %v242, %v241
    %v248 = vsel %vm151, %v233, 0
    %v251 = vsel %vm151, %v234, 0
    %253 = vmatprep.subr.bf16.mxu0 0
    %254 = vmatpush1.bf16.msra.mxu0 %v243
    %255 = vmatprep.subr.bf16.mxu0 0
    %256 = vmatpush1.bf16.msra.mxu0 %v244
    %257 = vmatprep.subr.bf16.mxu0 0
    %258 = vmatpush1.bf16.msra.mxu0 0
    %259 = vmatprep.subr.bf16.mxu0 0
    %260 = vmatpush1.bf16.msra.mxu0 0
    %261 = vmatprep.subr.bf16.mxu0 0
    %262 = vmatpush1.bf16.msra.mxu0 0
    %263 = vmatprep.subr.bf16.mxu0 0
    %264 = vmatpush1.bf16.msra.mxu0 0
    %265 = vmatprep.subr.bf16.mxu0 0
    %266 = vmatpush1.bf16.msra.mxu0 0
    %267 = vmatprep.subr.bf16.mxu0 0
    %268 = vmatpush1.bf16.msra.mxu0 0
    %269 = vmatprep.subr.bf16.mxu0 0
    %270 = vmatpush1.bf16.msra.mxu0 0
    %271 = vmatprep.subr.bf16.mxu0 0
    %272 = vmatpush1.bf16.msra.mxu0 0
    %273 = vmatprep.subr.bf16.mxu0 0
    %274 = vmatpush1.bf16.msra.mxu0 0
    %275 = vmatprep.subr.bf16.mxu0 0
    %276 = vmatpush1.bf16.msra.mxu0 0
    %277 = vmatprep.subr.bf16.mxu0 0
    %278 = vmatpush1.bf16.msra.mxu0 0
    %279 = vmatprep.subr.bf16.mxu0 0
    %280 = vmatpush1.bf16.msra.mxu0 0
    %281 = vmatprep.subr.bf16.mxu0 0
    %282 = vmatpush1.bf16.msra.mxu0 0
    %283 = vmatprep.subr.bf16.mxu0 0
    %284 = vmatpush1.bf16.msra.mxu0 0
    %285 = vmatprep.mubr.bf16.mxu0 0
    %286 = vmatmul.mubr.bf16.gmra.mrb[0].mxu0 %v248
    %v287 = vpop.f32.mrb[0].mxu0
    %v288 = vadd.f32 0.0, %v287
    %v289 = vpop.f32.mrb[0].mxu0
    %v290 = vpop.f32.mrb[0].mxu0
    %v291 = vadd.f32 0.0, %v290
    %v292 = vpop.f32.mrb[0].mxu0
    %293 = vmatprep.mubr.bf16.mxu0 0
    %294 = vmatmul.mubr.bf16.gmra.mrb[0].mxu0 %v251
    %v295 = vpop.f32.mrb[0].mxu0
    %v296 = vadd.f32 0.0, %v295
    %v297 = vpop.f32.mrb[0].mxu0
    %v298 = vpop.f32.mrb[0].mxu0
    %v299 = vadd.f32 0.0, %v298
    %v300 = vpop.f32.mrb[0].mxu0
    %301 = vdwg.mxu0
    %v306 = vunpack.c.l.b16 %v35
    %v307 = vunpack.c.l.b16 %v36
    %v308 = vunpack.c.l.b16 %v37
    %v309 = vunpack.c.l.b16 %v38
    %v310 = vpack.c.b16 %v307, %v306
    %v311 = vpack.c.b16 %v309, %v308
    %314 = vmatprep.subr.bf16.mxu0 0
    %315 = vmatpush1.bf16.msra.mxu0 %v310
    %316 = vmatprep.subr.bf16.mxu0 0
    %317 = vmatpush1.bf16.msra.mxu0 %v311
    %318 = vmatprep.subr.bf16.mxu0 0
    %319 = vmatpush1.bf16.msra.mxu0 0
    %320 = vmatprep.subr.bf16.mxu0 0
    %321 = vmatpush1.bf16.msra.mxu0 0
    %322 = vmatprep.subr.bf16.mxu0 0
    %323 = vmatpush1.bf16.msra.mxu0 0
    %324 = vmatprep.subr.bf16.mxu0 0
    %325 = vmatpush1.bf16.msra.mxu0 0
    %326 = vmatprep.subr.bf16.mxu0 0
    %327 = vmatpush1.bf16.msra.mxu0 0
    %328 = vmatprep.subr.bf16.mxu0 0
    %329 = vmatpush1.bf16.msra.mxu0 0
    %330 = vmatprep.subr.bf16.mxu0 0
    %331 = vmatpush1.bf16.msra.mxu0 0
    %332 = vmatprep.subr.bf16.mxu0 0
    %333 = vmatpush1.bf16.msra.mxu0 0
    %334 = vmatprep.subr.bf16.mxu0 0
    %335 = vmatpush1.bf16.msra.mxu0 0
    %336 = vmatprep.subr.bf16.mxu0 0
    %337 = vmatpush1.bf16.msra.mxu0 0
    %338 = vmatprep.subr.bf16.mxu0 0
    %339 = vmatpush1.bf16.msra.mxu0 0
    %340 = vmatprep.subr.bf16.mxu0 0
    %341 = vmatpush1.bf16.msra.mxu0 0
    %342 = vmatprep.subr.bf16.mxu0 0
    %343 = vmatpush1.bf16.msra.mxu0 0
    %344 = vmatprep.subr.bf16.mxu0 0
    %345 = vmatpush1.bf16.msra.mxu0 0
    %346 = vmatprep.mubr.bf16.mxu0 0
    %347 = vmatmul.mubr.bf16.gmra.mrb[0].mxu0 %v248
    %v348 = vpop.f32.mrb[0].mxu0
    %v349 = vadd.f32 0.0, %v348
    %v350 = vpop.f32.mrb[0].mxu0
    %v351 = vpop.f32.mrb[0].mxu0
    %v352 = vadd.f32 0.0, %v351
    %v353 = vpop.f32.mrb[0].mxu0
    %354 = vmatprep.mubr.bf16.mxu0 0
    %355 = vmatmul.mubr.bf16.gmra.mrb[0].mxu0 %v251
    %v356 = vpop.f32.mrb[0].mxu0
    %v357 = vadd.f32 0.0, %v356
    %v358 = vpop.f32.mrb[0].mxu0
    %v359 = vpop.f32.mrb[0].mxu0
    %v360 = vadd.f32 0.0, %v359
    %v361 = vpop.f32.mrb[0].mxu0
    %362 = vdwg.mxu0
    %v367 = vunpack.c.l.b16 %v39
    %v368 = vunpack.c.l.b16 %v40
    %v369 = vunpack.c.l.b16 %v41
    %v370 = vunpack.c.l.b16 %v42
    %v371 = vpack.c.b16 %v368, %v367
    %v372 = vpack.c.b16 %v370, %v369
    %375 = vmatprep.subr.bf16.mxu0 0
    %376 = vmatpush1.bf16.msra.mxu0 %v371
    %377 = vmatprep.subr.bf16.mxu0 0
    %378 = vmatpush1.bf16.msra.mxu0 %v372
    %379 = vmatprep.subr.bf16.mxu0 0
    %380 = vmatpush1.bf16.msra.mxu0 0
    %381 = vmatprep.subr.bf16.mxu0 0
    %382 = vmatpush1.bf16.msra.mxu0 0
    %383 = vmatprep.subr.bf16.mxu0 0
    %384 = vmatpush1.bf16.msra.mxu0 0
    %385 = vmatprep.subr.bf16.mxu0 0
    %386 = vmatpush1.bf16.msra.mxu0 0
    %387 = vmatprep.subr.bf16.mxu0 0
    %388 = vmatpush1.bf16.msra.mxu0 0
    %389 = vmatprep.subr.bf16.mxu0 0
    %390 = vmatpush1.bf16.msra.mxu0 0
    %391 = vmatprep.subr.bf16.mxu0 0
    %392 = vmatpush1.bf16.msra.mxu0 0
    %393 = vmatprep.subr.bf16.mxu0 0
    %394 = vmatpush1.bf16.msra.mxu0 0
    %395 = vmatprep.subr.bf16.mxu0 0
    %396 = vmatpush1.bf16.msra.mxu0 0
    %397 = vmatprep.subr.bf16.mxu0 0
    %398 = vmatpush1.bf16.msra.mxu0 0
    %399 = vmatprep.subr.bf16.mxu0 0
    %400 = vmatpush1.bf16.msra.mxu0 0
    %401 = vmatprep.subr.bf16.mxu0 0
    %402 = vmatpush1.bf16.msra.mxu0 0
    %403 = vmatprep.subr.bf16.mxu0 0
    %404 = vmatpush1.bf16.msra.mxu0 0
    %405 = vmatprep.subr.bf16.mxu0 0
    %406 = vmatpush1.bf16.msra.mxu0 0
    %407 = vmatprep.mubr.bf16.mxu0 0
    %408 = vmatmul.mubr.bf16.gmra.mrb[0].mxu0 %v248
    %v409 = vpop.f32.mrb[0].mxu0
    %v410 = vadd.f32 0.0, %v409
    %v411 = vpop.f32.mrb[0].mxu0
    %v412 = vpop.f32.mrb[0].mxu0
    %v413 = vadd.f32 0.0, %v412
    %v414 = vpop.f32.mrb[0].mxu0
    %415 = vmatprep.mubr.bf16.mxu0 0
    %416 = vmatmul.mubr.bf16.gmra.mrb[0].mxu0 %v251
    %v417 = vpop.f32.mrb[0].mxu0
    %v418 = vadd.f32 0.0, %v417
    %v419 = vpop.f32.mrb[0].mxu0
    %v420 = vpop.f32.mrb[0].mxu0
    %v421 = vadd.f32 0.0, %v420
    %v422 = vpop.f32.mrb[0].mxu0
    %423 = vdwg.mxu0
    %v425 = vsel %vm151, %v288, 0
    %v428 = vsel %vm151, %v291, 0
    %v431 = vsel %vm151, %v296, 0
    %v434 = vsel %vm151, %v299, 0
    %v437 = vsel %vm151, %v349, 0
    %v440 = vsel %vm151, %v352, 0
    %v443 = vsel %vm151, %v357, 0
    %v446 = vsel %vm151, %v360, 0
    %448 = vmatprep.subr.mxu0 0.0
    %449 = vmatpush1.xpose.msra.mxu0 %v437
    %450 = vmatprep.subr.mxu0 0.0
    %451 = vmatpush1.xpose.msra.mxu0 %v440
    %452 = vmatprep.subr.mxu0 0.0
    %453 = vmatpush1.xpose.msra.mxu0 %v443
    %454 = vmatprep.subr.mxu0 0.0
    %455 = vmatpush1.xpose.msra.mxu0 %v446
    %456 = vmatprep.subr.mxu0 0.0
    %457 = vmatpush1.xpose.msra.mxu0 0.0
    %458 = vmatprep.subr.mxu0 0.0
    %459 = vmatpush1.xpose.msra.mxu0 0.0
    %460 = vmatprep.subr.mxu0 0.0
    %461 = vmatpush1.xpose.msra.mxu0 0.0
    %462 = vmatprep.subr.mxu0 0.0
    %463 = vmatpush1.xpose.msra.mxu0 0.0
    %464 = vmatprep.subr.mxu0 0.0
    %465 = vmatpush1.xpose.msra.mxu0 0.0
    %466 = vmatprep.subr.mxu0 0.0
    %467 = vmatpush1.xpose.msra.mxu0 0.0
    %468 = vmatprep.subr.mxu0 0.0
    %469 = vmatpush1.xpose.msra.mxu0 0.0
    %470 = vmatprep.subr.mxu0 0.0
    %471 = vmatpush1.xpose.msra.mxu0 0.0
    %472 = vmatprep.subr.mxu0 0.0
    %473 = vmatpush1.xpose.msra.mxu0 0.0
    %474 = vmatprep.subr.mxu0 0.0
    %475 = vmatpush1.xpose.msra.mxu0 0.0
    %476 = vmatprep.subr.mxu0 0.0
    %477 = vmatpush1.xpose.msra.mxu0 0.0
    %478 = vmatprep.subr.mxu0 0.0
    %479 = vmatpush1.xpose.msra.mxu0 0.0
    %480 = vmatprep.subr.mxu0 0.0
    %481 = vmatpush1.xpose.msra.mxu0 0.0
    %482 = vmatprep.subr.mxu0 0.0
    %483 = vmatpush1.xpose.msra.mxu0 0.0
    %484 = vmatprep.subr.mxu0 0.0
    %485 = vmatpush1.xpose.msra.mxu0 0.0
    %486 = vmatprep.subr.mxu0 0.0
    %487 = vmatpush1.xpose.msra.mxu0 0.0
    %488 = vmatprep.subr.mxu0 0.0
    %489 = vmatpush1.xpose.msra.mxu0 0.0
    %490 = vmatprep.subr.mxu0 0.0
    %491 = vmatpush1.xpose.msra.mxu0 0.0
    %492 = vmatprep.subr.mxu0 0.0
    %493 = vmatpush1.xpose.msra.mxu0 0.0
    %494 = vmatprep.subr.mxu0 0.0
    %495 = vmatpush1.xpose.msra.mxu0 0.0
    %496 = vmatprep.subr.mxu0 0.0
    %497 = vmatpush1.xpose.msra.mxu0 0.0
    %498 = vmatprep.subr.mxu0 0.0
    %499 = vmatpush1.xpose.msra.mxu0 0.0
    %500 = vmatprep.subr.mxu0 0.0
    %501 = vmatpush1.xpose.msra.mxu0 0.0
    %502 = vmatprep.subr.mxu0 0.0
    %503 = vmatpush1.xpose.msra.mxu0 0.0
    %504 = vmatprep.subr.mxu0 0.0
    %505 = vmatpush1.xpose.msra.mxu0 0.0
    %506 = vmatprep.subr.mxu0 0.0
    %507 = vmatpush1.xpose.msra.mxu0 0.0
    %508 = vmatprep.subr.mxu0 0.0
    %509 = vmatpush1.xpose.msra.mxu0 0.0
    %510 = vmatprep.subr.mxu0 0.0
    %511 = vmatpush1.xpose.msra.mxu0 0.0
    %512 = vmatprep.mubr.f32.mxu0 0.0
    %513 = vmatmul.mubr.f32.gmra.mrb[0].mxu0 %v425
    %v514 = vpop.f32.mrb[0].mxu0
    %v515 = vadd.f32 %v21, %v514
    %v516 = vpop.f32.mrb[0].mxu0
    %517 = vmatprep.mubr.f32.mxu0 0.0
    %518 = vmatmul.mubr.f32.gmra.mrb[0].mxu0 %v428
    %v519 = vpop.f32.mrb[0].mxu0
    %v520 = vadd.f32 %v22, %v519
    %v521 = vpop.f32.mrb[0].mxu0
    %522 = vmatprep.mubr.f32.mxu0 0.0
    %523 = vmatmul.mubr.f32.gmra.mrb[0].mxu0 %v431
    %v524 = vpop.f32.mrb[0].mxu0
    %v525 = vadd.f32 %v23, %v524
    %v526 = vpop.f32.mrb[0].mxu0
    %527 = vmatprep.mubr.f32.mxu0 0.0
    %528 = vmatmul.mubr.f32.gmra.mrb[0].mxu0 %v434
    %v529 = vpop.f32.mrb[0].mxu0
    %v530 = vadd.f32 %v24, %v529
    %v531 = vpop.f32.mrb[0].mxu0
    %532 = vdwg.mxu0
    %v533 = vsel %vm151, %v515, -inf
    %534 = vmax.xlane.f32.xlu0 %v533
    %v535 = vpop.xlane.xlu0 %534
    %v536 = vsel %vm151, %v520, -inf
    %537 = vmax.xlane.f32.xlu0 %v536
    %v538 = vpop.xlane.xlu0 %537
    %v539 = vsel %vm151, %v525, -inf
    %540 = vmax.xlane.f32.xlu0 %v539
    %v541 = vpop.xlane.xlu0 %540
    %v542 = vsel %vm151, %v530, -inf
    %543 = vmax.xlane.f32.xlu0 %v542
    %v544 = vpop.xlane.xlu0 %543
    %v545 = vsub.f32 %v515, %v535
    %v546 = vsub.f32 %v520, %v538
    %v547 = vsub.f32 %v525, %v541
    %v548 = vsub.f32 %v530, %v544
    %v549 = vmul.f32 %v545, 1.442695
    %v550 = vpow.pop %v549
    %v551 = vmul.f32 %v546, 1.442695
    %v552 = vpow.pop %v551
    %v553 = vmul.f32 %v547, 1.442695
    %v554 = vpow.pop %v553
    %v555 = vmul.f32 %v548, 1.442695
    %v556 = vpow.pop %v555
    %v557 = vsel %vm151, %v550, 0.0
    %558 = vadd.xlane.f32.xlu0 %v557
    %v559 = vpop.xlane.xlu0 %558
    %v560 = vsel %vm151, %v552, 0.0
    %561 = vadd.xlane.f32.xlu0 %v560
    %v562 = vpop.xlane.xlu0 %561
    %v563 = vsel %vm151, %v554, 0.0
    %564 = vadd.xlane.f32.xlu0 %v563
    %v565 = vpop.xlane.xlu0 %564
    %v566 = vsel %vm151, %v556, 0.0
    %567 = vadd.xlane.f32.xlu0 %v566
    %v568 = vpop.xlane.xlu0 %567
    %v569 = vrcp.pop %v559
    %v570 = vrcp.pop %v562
    %v571 = vrcp.pop %v565
    %v572 = vrcp.pop %v568
    %v573 = vmul.f32 %v550, %v569
    %v574 = vmul.f32 %v552, %v570
    %v575 = vmul.f32 %v554, %v571
    %v576 = vmul.f32 %v556, %v572
    %v577 = vpack.c.bf16 %v574, %v573
    %v578 = vpack.c.bf16 %v576, %v575
    %v579 = vpack.c.bf16 %v413, %v410
    %v580 = vpack.c.bf16 %v421, %v418
    %v582 = vsel %vm151, %v577, 0
    %v585 = vsel %vm151, %v578, 0
    %587 = vmatprep.subr.bf16.mxu0 0
    %588 = vmatpush1.bf16.msra.mxu0 %v579
    %589 = vmatprep.subr.bf16.mxu0 0
    %590 = vmatpush1.bf16.msra.mxu0 %v580
    %591 = vmatprep.subr.bf16.mxu0 0
    %592 = vmatpush1.bf16.msra.mxu0 0
    %593 = vmatprep.subr.bf16.mxu0 0
    %594 = vmatpush1.bf16.msra.mxu0 0
    %595 = vmatprep.subr.bf16.mxu0 0
    %596 = vmatpush1.bf16.msra.mxu0 0
    %597 = vmatprep.subr.bf16.mxu0 0
    %598 = vmatpush1.bf16.msra.mxu0 0
    %599 = vmatprep.subr.bf16.mxu0 0
    %600 = vmatpush1.bf16.msra.mxu0 0
    %601 = vmatprep.subr.bf16.mxu0 0
    %602 = vmatpush1.bf16.msra.mxu0 0
    %603 = vmatprep.subr.bf16.mxu0 0
    %604 = vmatpush1.bf16.msra.mxu0 0
    %605 = vmatprep.subr.bf16.mxu0 0
    %606 = vmatpush1.bf16.msra.mxu0 0
    %607 = vmatprep.subr.bf16.mxu0 0
    %608 = vmatpush1.bf16.msra.mxu0 0
    %609 = vmatprep.subr.bf16.mxu0 0
    %610 = vmatpush1.bf16.msra.mxu0 0
    %611 = vmatprep.subr.bf16.mxu0 0
    %612 = vmatpush1.bf16.msra.mxu0 0
    %613 = vmatprep.subr.bf16.mxu0 0
    %614 = vmatpush1.bf16.msra.mxu0 0
    %615 = vmatprep.subr.bf16.mxu0 0
    %616 = vmatpush1.bf16.msra.mxu0 0
    %617 = vmatprep.subr.bf16.mxu0 0
    %618 = vmatpush1.bf16.msra.mxu0 0
    %619 = vmatprep.mubr.bf16.mxu0 0
    %620 = vmatmul.mubr.bf16.gmra.mrb[0].mxu0 %v582
    %v621 = vpop.f32.mrb[0].mxu0
    %v622 = vadd.f32 0.0, %v621
    %v623 = vpop.f32.mrb[0].mxu0
    %v624 = vpop.f32.mrb[0].mxu0
    %v625 = vadd.f32 0.0, %v624
    %v626 = vpop.f32.mrb[0].mxu0
    %627 = vmatprep.mubr.bf16.mxu0 0
    %628 = vmatmul.mubr.bf16.gmra.mrb[0].mxu0 %v585
    %v629 = vpop.f32.mrb[0].mxu0
    %v630 = vadd.f32 0.0, %v629
    %v631 = vpop.f32.mrb[0].mxu0
    %v632 = vpop.f32.mrb[0].mxu0
    %v633 = vadd.f32 0.0, %v632
    %v634 = vpop.f32.mrb[0].mxu0
    %635 = vdwg.mxu0
    %v636 = vpack.c.bf16 %v625, %v622
    %v637 = vpack.c.bf16 %v633, %v630
    %v642 = vunpack.c.l.b16 %v43
    %v643 = vunpack.c.l.b16 %v44
    %v644 = vunpack.c.l.b16 %v45
    %v645 = vunpack.c.l.b16 %v46
    %v646 = vpack.c.b16 %v643, %v642
    %v647 = vpack.c.b16 %v645, %v644
    %v651 = vsel %vm151, %v636, 0
    %v654 = vsel %vm151, %v637, 0
    %656 = vmatprep.subr.bf16.mxu0 0
    %657 = vmatpush1.bf16.msra.mxu0 %v646
    %658 = vmatprep.subr.bf16.mxu0 0
    %659 = vmatpush1.bf16.msra.mxu0 %v647
    %660 = vmatprep.subr.bf16.mxu0 0
    %661 = vmatpush1.bf16.msra.mxu0 0
    %662 = vmatprep.subr.bf16.mxu0 0
    %663 = vmatpush1.bf16.msra.mxu0 0
    %664 = vmatprep.subr.bf16.mxu0 0
    %665 = vmatpush1.bf16.msra.mxu0 0
    %666 = vmatprep.subr.bf16.mxu0 0
    %667 = vmatpush1.bf16.msra.mxu0 0
    %668 = vmatprep.subr.bf16.mxu0 0
    %669 = vmatpush1.bf16.msra.mxu0 0
    %670 = vmatprep.subr.bf16.mxu0 0
    %671 = vmatpush1.bf16.msra.mxu0 0
    %672 = vmatprep.subr.bf16.mxu0 0
    %673 = vmatpush1.bf16.msra.mxu0 0
    %674 = vmatprep.subr.bf16.mxu0 0
    %675 = vmatpush1.bf16.msra.mxu0 0
    %676 = vmatprep.subr.bf16.mxu0 0
    %677 = vmatpush1.bf16.msra.mxu0 0
    %678 = vmatprep.subr.bf16.mxu0 0
    %679 = vmatpush1.bf16.msra.mxu0 0
    %680 = vmatprep.subr.bf16.mxu0 0
    %681 = vmatpush1.bf16.msra.mxu0 0
    %682 = vmatprep.subr.bf16.mxu0 0
    %683 = vmatpush1.bf16.msra.mxu0 0
    %684 = vmatprep.subr.bf16.mxu0 0
    %685 = vmatpush1.bf16.msra.mxu0 0
    %686 = vmatprep.subr.bf16.mxu0 0
    %687 = vmatpush1.bf16.msra.mxu0 0
    %688 = vmatprep.mubr.bf16.mxu0 0
    %689 = vmatmul.mubr.bf16.gmra.mrb[0].mxu0 %v651
    %v690 = vpop.f32.mrb[0].mxu0
    %v691 = vadd.f32 0.0, %v690
    %v692 = vpop.f32.mrb[0].mxu0
    %v693 = vpop.f32.mrb[0].mxu0
    %v694 = vadd.f32 0.0, %v693
    %v695 = vpop.f32.mrb[0].mxu0
    %696 = vmatprep.mubr.bf16.mxu0 0
    %697 = vmatmul.mubr.bf16.gmra.mrb[0].mxu0 %v654
    %v698 = vpop.f32.mrb[0].mxu0
    %v699 = vadd.f32 0.0, %v698
    %v700 = vpop.f32.mrb[0].mxu0
    %v701 = vpop.f32.mrb[0].mxu0
    %v702 = vadd.f32 0.0, %v701
    %v703 = vpop.f32.mrb[0].mxu0
    %704 = vdwg.mxu0
    %v705 = vadd.f32 %v137, %v691
    %v706 = vadd.f32 %v140, %v694
    %v707 = vadd.f32 %v145, %v699
    %v708 = vadd.f32 %v148, %v702
    %v709 = vsel %vm151, %v705, 0.0
    %710 = vadd.xlane.f32.xlu0 %v709
    %v711 = vpop.xlane.xlu0 %710
    %v712 = vsel %vm151, %v706, 0.0
    %713 = vadd.xlane.f32.xlu0 %v712
    %v714 = vpop.xlane.xlu0 %713
    %v715 = vsel %vm151, %v707, 0.0
    %716 = vadd.xlane.f32.xlu0 %v715
    %v717 = vpop.xlane.xlu0 %716
    %v718 = vsel %vm151, %v708, 0.0
    %719 = vadd.xlane.f32.xlu0 %v718
    %v720 = vpop.xlane.xlu0 %719
    %v721 = vmul.f32 %v711, %v164
    %v722 = vmul.f32 %v714, %v164
    %v723 = vmul.f32 %v717, %v164
    %v724 = vmul.f32 %v720, %v164
    %v725 = vmul.f32 %v705, %v705
    %v726 = vmul.f32 %v706, %v706
    %v727 = vmul.f32 %v707, %v707
    %v728 = vmul.f32 %v708, %v708
    %v729 = vsel %vm151, %v725, 0.0
    %730 = vadd.xlane.f32.xlu0 %v729
    %v731 = vpop.xlane.xlu0 %730
    %v732 = vsel %vm151, %v726, 0.0
    %733 = vadd.xlane.f32.xlu0 %v732
    %v734 = vpop.xlane.xlu0 %733
    %v735 = vsel %vm151, %v727, 0.0
    %736 = vadd.xlane.f32.xlu0 %v735
    %v737 = vpop.xlane.xlu0 %736
    %v738 = vsel %vm151, %v728, 0.0
    %739 = vadd.xlane.f32.xlu0 %v738
    %v740 = vpop.xlane.xlu0 %739
    %v741 = vmul.f32 %v731, %v164
    %v742 = vmul.f32 %v734, %v164
    %v743 = vmul.f32 %v737, %v164
    %v744 = vmul.f32 %v740, %v164
    %v745 = vmul.f32 %v721, %v721
    %v746 = vmul.f32 %v722, %v722
    %v747 = vmul.f32 %v723, %v723
    %v748 = vmul.f32 %v724, %v724
    %v749 = vsub.f32 %v741, %v745
    %v750 = vsub.f32 %v742, %v746
    %v751 = vsub.f32 %v743, %v747
    %v752 = vsub.f32 %v744, %v748
    %v753 = vmax.f32 %v749, 0.0
    %v754 = vmax.f32 %v750, 0.0
    %v755 = vmax.f32 %v751, 0.0
    %v756 = vmax.f32 %v752, 0.0
    %v757 = vsub.f32 %v705, %v721
    %v758 = vsub.f32 %v706, %v722
    %v759 = vsub.f32 %v707, %v723
    %v760 = vsub.f32 %v708, %v724
    %v761 = vadd.f32 %v753, 1e-06
    %v762 = vadd.f32 %v754, 1e-06
    %v763 = vadd.f32 %v755, 1e-06
    %v764 = vadd.f32 %v756, 1e-06
    %v765 = vrsqrt.pop %v761
    %v766 = vrsqrt.pop %v762
    %v767 = vrsqrt.pop %v763
    %v768 = vrsqrt.pop %v764
    %v769 = vmul.f32 %v757, %v765
    %v770 = vmul.f32 %v758, %v766
    %v771 = vmul.f32 %v759, %v767
    %v772 = vmul.f32 %v760, %v768
    %v773 = vlaneseq
    %v774 = vshrl.u32 %v773, 7
    %v775 = vsub.s32 3, %v774
    %v776 = vrot.slane %v19, %v775
    %v777 = vmul.f32 %v769, %v776
    %v778 = vmul.f32 %v770, %v776
    %v779 = vmul.f32 %v771, %v776
    %v780 = vmul.f32 %v772, %v776
    %v781 = vlaneseq
    %v782 = vshrl.u32 %v781, 7
    %v783 = vsub.s32 4, %v782
    %v784 = vrot.slane %v19, %v783
    %v785 = vadd.f32 %v777, %v784
    %v786 = vadd.f32 %v778, %v784
    %v787 = vadd.f32 %v779, %v784
    %v788 = vadd.f32 %v780, %v784
    %v789 = vpack.c.bf16 %v786, %v785
    %v790 = vpack.c.bf16 %v788, %v787
    %v791 = vlaneseq
    %v792 = vshrl.u32 %v791, 7
    %v793 = vsub.s32 0, %v792
    %v794 = vrot.slane %v20, %v793
    %v799 = vunpack.c.l.b16 %v47
    %v800 = vunpack.c.l.b16 %v48
    %v801 = vunpack.c.l.b16 %v49
    %v802 = vunpack.c.l.b16 %v50
    %v803 = vpack.c.b16 %v800, %v799
    %v804 = vpack.c.b16 %v802, %v801
    %v808 = vsel %vm151, %v789, 0
    %v811 = vsel %vm151, %v790, 0
    %813 = vmatprep.subr.bf16.mxu0 0
    %814 = vmatpush1.bf16.msra.mxu0 %v803
    %815 = vmatprep.subr.bf16.mxu0 0
    %816 = vmatpush1.bf16.msra.mxu0 %v804
    %817 = vmatprep.subr.bf16.mxu0 0
    %818 = vmatpush1.bf16.msra.mxu0 0
    %819 = vmatprep.subr.bf16.mxu0 0
    %820 = vmatpush1.bf16.msra.mxu0 0
    %821 = vmatprep.subr.bf16.mxu0 0
    %822 = vmatpush1.bf16.msra.mxu0 0
    %823 = vmatprep.subr.bf16.mxu0 0
    %824 = vmatpush1.bf16.msra.mxu0 0
    %825 = vmatprep.subr.bf16.mxu0 0
    %826 = vmatpush1.bf16.msra.mxu0 0
    %827 = vmatprep.subr.bf16.mxu0 0
    %828 = vmatpush1.bf16.msra.mxu0 0
    %829 = vmatprep.subr.bf16.mxu0 0
    %830 = vmatpush1.bf16.msra.mxu0 0
    %831 = vmatprep.subr.bf16.mxu0 0
    %832 = vmatpush1.bf16.msra.mxu0 0
    %833 = vmatprep.subr.bf16.mxu0 0
    %834 = vmatpush1.bf16.msra.mxu0 0
    %835 = vmatprep.subr.bf16.mxu0 0
    %836 = vmatpush1.bf16.msra.mxu0 0
    %837 = vmatprep.subr.bf16.mxu0 0
    %838 = vmatpush1.bf16.msra.mxu0 0
    %839 = vmatprep.subr.bf16.mxu0 0
    %840 = vmatpush1.bf16.msra.mxu0 0
    %841 = vmatprep.subr.bf16.mxu0 0
    %842 = vmatpush1.bf16.msra.mxu0 0
    %843 = vmatprep.subr.bf16.mxu0 0
    %844 = vmatpush1.bf16.msra.mxu0 0
    %845 = vmatprep.mubr.bf16.mxu0 0
    %846 = vmatmul.mubr.bf16.gmra.mrb[0].mxu0 %v808
    %v847 = vpop.f32.mrb[0].mxu0
    %v848 = vadd.f32 %v794, %v847
    %v849 = vpop.f32.mrb[0].mxu0
    %v850 = vpop.f32.mrb[0].mxu0
    %v851 = vadd.f32 %v794, %v850
    %v852 = vpop.f32.mrb[0].mxu0
    %853 = vmatprep.mubr.bf16.mxu0 0
    %854 = vmatmul.mubr.bf16.gmra.mrb[0].mxu0 %v811
    %v855 = vpop.f32.mrb[0].mxu0
    %v856 = vadd.f32 %v794, %v855
    %v857 = vpop.f32.mrb[0].mxu0
    %v858 = vpop.f32.mrb[0].mxu0
    %v859 = vadd.f32 %v794, %v858
    %v860 = vpop.f32.mrb[0].mxu0
    %861 = vdwg.mxu0
    %v862 = vmul.f32 %v848, %v848
    %v863 = vmul.f32 %v851, %v851
    %v864 = vmul.f32 %v856, %v856
    %v865 = vmul.f32 %v859, %v859
    %v866 = vmul.f32 %v848, %v862
    %v867 = vmul.f32 %v851, %v863
    %v868 = vmul.f32 %v856, %v864
    %v869 = vmul.f32 %v859, %v865
    %v870 = vmul.f32 %v866, 0.044715
    %v871 = vmul.f32 %v867, 0.044715
    %v872 = vmul.f32 %v868, 0.044715
    %v873 = vmul.f32 %v869, 0.044715
    %v874 = vadd.f32 %v848, %v870
    %v875 = vadd.f32 %v851, %v871
    %v876 = vadd.f32 %v856, %v872
    %v877 = vadd.f32 %v859, %v873
    %v878 = vmul.f32 %v874, 0.7978846
    %v879 = vmul.f32 %v875, 0.7978846
    %v880 = vmul.f32 %v876, 0.7978846
    %v881 = vmul.f32 %v877, 0.7978846
    %v882 = vtanh.pop %v878
    %v883 = vtanh.pop %v879
    %v884 = vtanh.pop %v880
    %v885 = vtanh.pop %v881
    %v886 = vadd.f32 %v882, 1.0
    %v887 = vadd.f32 %v883, 1.0
    %v888 = vadd.f32 %v884, 1.0
    %v889 = vadd.f32 %v885, 1.0
    %v890 = vmul.f32 %v886, 0.5
    %v891 = vmul.f32 %v887, 0.5
    %v892 = vmul.f32 %v888, 0.5
    %v893 = vmul.f32 %v889, 0.5
    %v894 = vmul.f32 %v848, %v890
    %v895 = vmul.f32 %v851, %v891
    %v896 = vmul.f32 %v856, %v892
    %v897 = vmul.f32 %v859, %v893
    %v898 = vpack.c.bf16 %v895, %v894
    %v899 = vpack.c.bf16 %v897, %v896
    %v908 = vunpack.c.l.b16 %v51
    %v909 = vunpack.c.l.b16 %v52
    %v910 = vunpack.c.l.b16 %v53
    %v911 = vunpack.c.l.b16 %v54
    %v912 = vunpack.c.l.b16 %v55
    %v913 = vunpack.c.l.b16 %v56
    %v914 = vunpack.c.l.b16 %v57
    %v915 = vunpack.c.l.b16 %v58
    %v916 = vpack.c.b16 %v909, %v908
    %v917 = vpack.c.b16 %v911, %v910
    %v918 = vpack.c.b16 %v913, %v912
    %v919 = vpack.c.b16 %v915, %v914
    %vm924 = vcmask 523264
    %v926 = vsel %vm924, %v898, 0
    %v929 = vsel %vm924, %v899, 0
    %931 = vmatprep.subr.bf16.mxu0 0
    %932 = vmatpush1.bf16.msra.mxu0 %v916
    %933 = vmatprep.subr.bf16.mxu0 0
    %934 = vmatpush1.bf16.msra.mxu0 %v917
    %935 = vmatprep.subr.bf16.mxu0 0
    %936 = vmatpush1.bf16.msra.mxu0 %v918
    %937 = vmatprep.subr.bf16.mxu0 0
    %938 = vmatpush1.bf16.msra.mxu0 %v919
    %939 = vmatprep.subr.bf16.mxu0 0
    %940 = vmatpush1.bf16.msra.mxu0 0
    %941 = vmatprep.subr.bf16.mxu0 0
    %942 = vmatpush1.bf16.msra.mxu0 0
    %943 = vmatprep.subr.bf16.mxu0 0
    %944 = vmatpush1.bf16.msra.mxu0 0
    %945 = vmatprep.subr.bf16.mxu0 0
    %946 = vmatpush1.bf16.msra.mxu0 0
    %947 = vmatprep.subr.bf16.mxu0 0
    %948 = vmatpush1.bf16.msra.mxu0 0
    %949 = vmatprep.subr.bf16.mxu0 0
    %950 = vmatpush1.bf16.msra.mxu0 0
    %951 = vmatprep.subr.bf16.mxu0 0
    %952 = vmatpush1.bf16.msra.mxu0 0
    %953 = vmatprep.subr.bf16.mxu0 0
    %954 = vmatpush1.bf16.msra.mxu0 0
    %955 = vmatprep.subr.bf16.mxu0 0
    %956 = vmatpush1.bf16.msra.mxu0 0
    %957 = vmatprep.subr.bf16.mxu0 0
    %958 = vmatpush1.bf16.msra.mxu0 0
    %959 = vmatprep.subr.bf16.mxu0 0
    %960 = vmatpush1.bf16.msra.mxu0 0
    %961 = vmatprep.subr.bf16.mxu0 0
    %962 = vmatpush1.bf16.msra.mxu0 0
    %963 = vmatprep.mubr.bf16.mxu0 0
    %964 = vmatmul.mubr.bf16.gmra.mrb[0].mxu0 %v926
    %v965 = vpop.f32.mrb[0].mxu0
    %v966 = vadd.f32 0.0, %v965
    %v967 = vpop.f32.mrb[0].mxu0
    %v968 = vpop.f32.mrb[0].mxu0
    %v969 = vadd.f32 0.0, %v968
    %v970 = vpop.f32.mrb[0].mxu0
    %971 = vmatprep.mubr.bf16.mxu0 0
    %972 = vmatmul.mubr.bf16.gmra.mrb[0].mxu0 %v929
    %v973 = vpop.f32.mrb[0].mxu0
    %v974 = vadd.f32 0.0, %v973
    %v975 = vpop.f32.mrb[0].mxu0
    %v976 = vpop.f32.mrb[0].mxu0
    %v977 = vadd.f32 0.0, %v976
    %v978 = vpop.f32.mrb[0].mxu0
    %979 = vdwg.mxu0
    %v980 = vadd.f32 %v705, %v966
    %v981 = vadd.f32 %v706, %v969
    %v982 = vadd.f32 %v707, %v974
    %v983 = vadd.f32 %v708, %v977
    %v984 = vlaneseq
    %v985 = vshrl.u32 %v984, 7
    %v986 = vsub.s32 5, %v985
    %v987 = vrot.slane %v19, %v986
    %v988 = vadd.f32 %v980, %v987
    %v989 = vadd.f32 %v981, %v987
    %v990 = vadd.f32 %v982, %v987
    %v991 = vadd.f32 %v983, %v987
    %v992 = vsel %vm151, %v988, 0.0
    %993 = vadd.xlane.f32.xlu0 %v992
    %v994 = vpop.xlane.xlu0 %993
    %v995 = vsel %vm151, %v989, 0.0
    %996 = vadd.xlane.f32.xlu0 %v995
    %v997 = vpop.xlane.xlu0 %996
    %v998 = vsel %vm151, %v990, 0.0
    %999 = vadd.xlane.f32.xlu0 %v998
    %v1000 = vpop.xlane.xlu0 %999
    %v1001 = vsel %vm151, %v991, 0.0
    %1002 = vadd.xlane.f32.xlu0 %v1001
    %v1003 = vpop.xlane.xlu0 %1002
    %v1004 = vmul.f32 %v994, %v164
    %v1005 = vmul.f32 %v997, %v164
    %v1006 = vmul.f32 %v1000, %v164
    %v1007 = vmul.f32 %v1003, %v164
    %v1008 = vmul.f32 %v988, %v988
    %v1009 = vmul.f32 %v989, %v989
    %v1010 = vmul.f32 %v990, %v990
    %v1011 = vmul.f32 %v991, %v991
    %v1012 = vsel %vm151, %v1008, 0.0
    %1013 = vadd.xlane.f32.xlu0 %v1012
    %v1014 = vpop.xlane.xlu0 %1013
    %v1015 = vsel %vm151, %v1009, 0.0
    %1016 = vadd.xlane.f32.xlu0 %v1015
    %v1017 = vpop.xlane.xlu0 %1016
    %v1018 = vsel %vm151, %v1010, 0.0
    %1019 = vadd.xlane.f32.xlu0 %v1018
    %v1020 = vpop.xlane.xlu0 %1019
    %v1021 = vsel %vm151, %v1011, 0.0
    %1022 = vadd.xlane.f32.xlu0 %v1021
    %v1023 = vpop.xlane.xlu0 %1022
    %v1024 = vmul.f32 %v1014, %v164
    %v1025 = vmul.f32 %v1017, %v164
    %v1026 = vmul.f32 %v1020, %v164
    %v1027 = vmul.f32 %v1023, %v164
    %v1028 = vmul.f32 %v1004, %v1004
    %v1029 = vmul.f32 %v1005, %v1005
    %v1030 = vmul.f32 %v1006, %v1006
    %v1031 = vmul.f32 %v1007, %v1007
    %v1032 = vsub.f32 %v1024, %v1028
    %v1033 = vsub.f32 %v1025, %v1029
    %v1034 = vsub.f32 %v1026, %v1030
    %v1035 = vsub.f32 %v1027, %v1031
    %v1036 = vmax.f32 %v1032, 0.0
    %v1037 = vmax.f32 %v1033, 0.0
    %v1038 = vmax.f32 %v1034, 0.0
    %v1039 = vmax.f32 %v1035, 0.0
    %v1040 = vsub.f32 %v988, %v1004
    %v1041 = vsub.f32 %v989, %v1005
    %v1042 = vsub.f32 %v990, %v1006
    %v1043 = vsub.f32 %v991, %v1007
    %v1044 = vadd.f32 %v1036, 1e-06
    %v1045 = vadd.f32 %v1037, 1e-06
    %v1046 = vadd.f32 %v1038, 1e-06
    %v1047 = vadd.f32 %v1039, 1e-06
    %v1048 = vrsqrt.pop %v1044
    %v1049 = vrsqrt.pop %v1045
    %v1050 = vrsqrt.pop %v1046
    %v1051 = vrsqrt.pop %v1047
    %v1052 = vmul.f32 %v1040, %v1048
    %v1053 = vmul.f32 %v1041, %v1049
    %v1054 = vmul.f32 %v1042, %v1050
    %v1055 = vmul.f32 %v1043, %v1051
    %v1056 = vlaneseq
    %v1057 = vshrl.u32 %v1056, 7
    %v1058 = vsub.s32 6, %v1057
    %v1059 = vrot.slane %v19, %v1058
    %v1060 = vmul.f32 %v1052, %v1059
    %v1061 = vmul.f32 %v1053, %v1059
    %v1062 = vmul.f32 %v1054, %v1059
    %v1063 = vmul.f32 %v1055, %v1059
    %v1064 = vlaneseq
    %v1065 = vshrl.u32 %v1064, 7
    %v1066 = vsub.s32 7, %v1065
    %v1067 = vrot.slane %v19, %v1066
    %v1068 = vadd.f32 %v1060, %v1067
    %v1069 = vadd.f32 %v1061, %v1067
    %v1070 = vadd.f32 %v1062, %v1067
    %v1071 = vadd.f32 %v1063, %v1067
    %v1072 = vsel %vm151, %v1068, 0.0
    %v1073 = vsel %vm151, %v1069, 0.0
    %v1074 = vadd.f32 %v1072, %v1073
    %v1075 = vrot.slane %v1074, 4
    %v1076 = vadd.f32 %v1074, %v1075
    %v1077 = vrot.slane %v1076, 2
    %v1078 = vadd.f32 %v1076, %v1077
    %v1079 = vrot.slane %v1078, 1
    %v1080 = vadd.f32 %v1078, %v1079
    %v1081 = vsel %vm151, %v1070, 0.0
    %v1082 = vsel %vm151, %v1071, 0.0
    %v1083 = vadd.f32 %v1081, %v1082
    %v1084 = vrot.slane %v1083, 4
    %v1085 = vadd.f32 %v1083, %v1084
    %v1086 = vrot.slane %v1085, 2
    %v1087 = vadd.f32 %v1085, %v1086
    %v1088 = vrot.slane %v1087, 1
    %v1089 = vadd.f32 %v1087, %v1088
    %v1090 = vrcp.pop 16.0
    %v1091 = vmul.f32 %v1080, %v1090
    %v1092 = vmul.f32 %v1089, %v1090
    %vm1095 = vcmask 1041409
    %v1096 = vsel %vm1095, %v1092, %v1091
    %vm1098 = vcmask 254976
    %1099 = vst.msk [vmem:[#allocation2] sm:$0x3] %vm1098, %v1096
    // Predicated region
    $region18: #{vision_encoder_forward.1} parent=1 // pred_check
      _
    $region19: #{vision_encoder_forward.1} parent=1 // pred_check_branch
      %1101 = sbr.rel (0) target = $region21
    $region20: #{vision_encoder_forward.1} parent=1 // pred_region
      %s1103 = ssub.s32 32, 32
      %1104 = vsyncadd [#allocation3], %s1103
      %s1106 = sshll.u32 [#allocation2], 4
      %s1107 = int_to_ptr.vmem [resolvable:$true] %s1106
      %1109 = dma.vmem_to_hbm [thread:$0]  %s1107, 32, %s4, [#allocation3]
    $region21: #{vision_encoder_forward.1} parent=1 // pred_fallthru
      _
    // Predicated region
    $region22: #{vision_encoder_forward.1} parent=1 // pred_check
      _
    $region23: #{vision_encoder_forward.1} parent=1 // pred_check_branch
      %1111 = sbr.rel (0) target = $region25
    $region24: #{vision_encoder_forward.1} parent=1 // pred_region
      %1112 = dma.done [#allocation3], 32
    $region25: #{vision_encoder_forward.1} parent=1 // pred_fallthru
      _
    %1113 = vsyncpa [#allocation3], 1

</llo_original>
